<compile_context>
chip_gen: v5e
topology: v5e:2x2
jax: 0.10.0
libtpu: 0.0.40
codegen_flags: <defaults>
</compile_context>

<pallas_src>
import functools

import jax
import jax.numpy as jnp
import numpy as np
from jax import lax
from jax.experimental import pallas as pl
from jax.experimental.pallas import tpu as pltpu


# ----------------------------- tap definitions -----------------------------

# (dy, dx, dilation) in cross-correlation order matching the HWIO weight reshape.
_TAPS_3X3 = tuple((dy, dx, 1) for dy in (-1, 0, 1) for dx in (-1, 0, 1))
_TAPS_LARGECONV = ((0, 0, 1),) + tuple(
    (dy, dx, d) for d in (1, 2, 4, 8) for dy in (-1, 0, 1) for dx in (-1, 0, 1))

# taps per dot: K = 2*Cin fills the 256-deep MXU on v6e/v7x; on v5e
# (128-deep) a K=2*128 dot is simply two full-depth passes, so no loss.
_MXU_PAIR = 2


def _tap_groups(taps, group=_MXU_PAIR):
    return tuple(tuple(taps[i:i + group]) for i in range(0, len(taps), group))


# ----------------------------- generation-aware config -----------------------------

@functools.lru_cache(maxsize=1)
def _tpu_mem_config():
    """VMEM budgeting: 64 MiB/TC parts (v7x-class) get smaller tiles, a lower
    vmem_limit cap and a single-buffered resident input; 128 MiB parts
    (v5e/v6e) get larger tiles and a higher cap."""
    vmem_cap = 128 << 20
    try:
        vmem_cap = int(pltpu.get_tpu_info().vmem_capacity_bytes)
    except Exception:
        pass
    small = vmem_cap <= (64 << 20)
    return {
        "tile_budget": (4 << 20) if small else (16 << 20),
        "vmem_limit_cap": (40 << 20) if small else (96 << 20),
        "single_buffer_resident": small,
    }


# ----------------------------- Pallas kernel -----------------------------

def _taps_conv_kernel(x_ref, w_ref, vec_ref, o_ref, xpad_ref, *,
                      tap_groups, pad, tile_h, h_in, w_out, cin, relu):
    """One fused conv (sum over taps) per (batch, row-tile) grid step.

    x_ref    : (1, H, W, Cin) resident un-padded activation (any float dtype)
    w_ref    : (T*Cin, Coutp) bf16 fused weight (BN scale pre-folded)
    vec_ref  : (1, Coutp) f32 shift / bias
    o_ref    : (1, tile_h, W, Coutp)
    xpad_ref : (H+2p, W+2p, Cin) bf16 VMEM scratch (pad + cast fused in-kernel)
    """
    t = pl.program_id(1)
    coutp = o_ref.shape[-1]

    # Fill the padded bf16 image once per batch element (replaces the XLA-level
    # jnp.pad(...).astype(bf16) that cost an extra HBM round trip).
    @pl.when(t == 0)
    def _():
        xpad_ref[...] = jnp.zeros(xpad_ref.shape, xpad_ref.dtype)
        xpad_ref[pad:pad + h_in, pad:pad + w_out, :] = (
            x_ref[0].astype(jnp.bfloat16))

    r0 = pl.multiple_of(t * tile_h, tile_h)
    acc = jnp.zeros((tile_h * w_out, coutp), jnp.float32)

    # Tap-group accumulate: no big im2col materialization, each dot has
    # K = group*Cin (group = 2 -> K = 256 at production Cin = 128).
    k0 = 0
    for group in tap_groups:
        pieces = []
        for (dy, dx, d) in group:
            rs = r0 + (pad + dy * d)              # dynamic row start
            cs = pad + dx * d                     # static col start
            pieces.append(xpad_ref[pl.ds(rs, tile_h), pl.ds(cs, w_out), :])
        xg = pieces[0] if len(pieces) == 1 else jnp.concatenate(pieces, axis=-1)
        kg = len(group) * cin
        acc += jnp.dot(xg.reshape(tile_h * w_out, kg),
                       w_ref[k0:k0 + kg, :],
                       preferred_element_type=jnp.float32)
        k0 += kg

    y = acc + vec_ref[0]          # folded-BN shift or conv bias
    if relu:
        y = jnp.maximum(y, 0.0)
    o_ref[0] = y.reshape(tile_h, w_out, coutp).astype(o_ref.dtype)


# ----------------------------- pallas_call wrapper -----------------------------

def _pick_tile_h(H, W, cin, coutp, budget):
    """Largest row-tile (preferring multiples of 8 for sublane alignment) whose
    per-step working set (tap pieces + f32 accumulator + double-buffered out
    tile) fits `budget`."""
    per_row = W * (_MXU_PAIR * cin * 2 + coutp * 4 * 3)

    def fits(th):
        return th * per_row <= budget

    best = 0
    for th in range(8, H + 1, 8):
        if H % th == 0 and fits(th):
            best = th
    if best == 0:
        for th in range(1, H + 1):
            if H % th == 0 and fits(th):
                best = th
    # TODO(synk): cdiv-based tiling with a masked ragged last tile would avoid
    # degenerate divisors at awkward production H.
    return max(best, 1)


def _run_taps_conv(x, w_flat, vec, *, taps, pad, relu, out_dtype):
    N, H, W, Cin = x.shape
    T = len(taps)
    K, Coutp = w_flat.shape
    assert K == T * Cin

    cfg = _tpu_mem_config()
    tile_h = _pick_tile_h(H, W, Cin, Coutp, cfg["tile_budget"])
    n_tiles = H // tile_h
    Hp, Wp = H + 2 * pad, W + 2 * pad

    w_bf = w_flat.astype(jnp.bfloat16)
    vec_f = jnp.asarray(vec, jnp.float32).reshape(1, Coutp)

    groups = _tap_groups(taps)
    kern = functools.partial(
        _taps_conv_kernel, tap_groups=groups, pad=pad, tile_h=tile_h,
        h_in=H, w_out=W, cin=Cin, relu=relu)

    # VMEM sizing: resident input block(s) + padded scratch + weights + vec +
    # double-buffered out tiles + per-dot pieces + f32 accumulator.
    in_bytes = H * W * Cin * x.dtype.itemsize
    pad_bytes = Hp * Wp * Cin * 2
    w_bytes = K * Coutp * 2
    out_tile_bytes = tile_h * W * Coutp * 4
    piece_bytes = tile_h * W * _MXU_PAIR * Cin * 2
    resident_bufs = 1 if cfg["single_buffer_resident"] else 2
    need = (resident_bufs * in_bytes + pad_bytes + 2 * w_bytes
            + 2 * out_tile_bytes + 2 * piece_bytes + tile_h * W * Coutp * 4)
    vmem_limit = int(min(max(need + need // 2, 32 << 20), cfg["vmem_limit_cap"]))

    out_elt = jnp.dtype(out_dtype).itemsize
    cost = pl.CostEstimate(
        flops=2 * N * H * W * K * Coutp,
        transcendentals=0,
        bytes_accessed=N * (in_bytes + H * W * Coutp * out_elt) + w_bytes)

    # Resident per-batch-element input block.  On small-VMEM parts (v7x) drop
    # it to a single buffer: its index_map is constant across the row-tile
    # axis, so double-buffering only doubles its footprint.
    x_block = (1, H, W, Cin)
    x_map = lambda n, t: (n, 0, 0, 0)
    x_spec = pl.BlockSpec(x_block, x_map)
    if cfg["single_buffer_resident"] and hasattr(pl, "Buffered"):
        try:
            x_spec = pl.BlockSpec(x_block, x_map, pipeline_mode=pl.Buffered(1))
        except Exception:
            x_spec = pl.BlockSpec(x_block, x_map)

    # NOTE(v7x): for best 2-TensorCore balance, N * n_tiles should be even and
    # >= 2; at production feature-map sizes n_tiles > 1 so this holds.
    out = pl.pallas_call(
        kern,
        out_shape=jax.ShapeDtypeStruct((N, H, W, Coutp), out_dtype),
        grid_spec=pltpu.PrefetchScalarGridSpec(
            num_scalar_prefetch=0,
            grid=(N, n_tiles),
            in_specs=[
                x_spec,
                pl.BlockSpec((K, Coutp), lambda n, t: (0, 0)),
                pl.BlockSpec((1, Coutp), lambda n, t: (0, 0)),
            ],
            out_specs=pl.BlockSpec((1, tile_h, W, Coutp),
                                   lambda n, t: (n, t, 0, 0)),
            scratch_shapes=[pltpu.VMEM((Hp, Wp, Cin), jnp.bfloat16)],
        ),
        compiler_params=pltpu.CompilerParams(
            # Row-tile axis must be "arbitrary": the padded-image scratch is
            # filled at t == 0 and reused by later tiles of the same element.
            dimension_semantics=("parallel", "arbitrary"),
            vmem_limit_bytes=vmem_limit),
        cost_estimate=cost,
    )(x, w_bf, vec_f)
    return out


# ----------------------------- conv ops -----------------------------

def conv3x3_bn_relu(x, w, scale, shift):
    """nn.Conv2d(cin, cout, 3, 1, 1) + BatchNorm2d (eval, folded) + ReLU.
    BN scale is folded into the weights; output is bf16 (all consumers read
    bf16 matmul operands anyway)."""
    Cin, Cout = w.shape[2], w.shape[3]
    w_flat = (w * scale).reshape(9 * Cin, Cout)
    return _run_taps_conv(x, w_flat, shift, taps=_TAPS_3X3, pad=1,
                          relu=True, out_dtype=jnp.bfloat16)


def _largeconv_weight(p, cin):
    """(37*cin, cout) weight matrix in tap order: 1x1, then 3x3 d=1/2/4/8."""
    cout = p["w1"].shape[-1]
    mats = [p["w1"]] + [p[k].reshape(9 * cin, cout)
                        for k in ("w3", "w5", "w9", "w15")]
    return jnp.concatenate(mats, axis=0)


def largeconv_pair(x, p_a, p_b):
    """contour_i / post_i LargeConv heads sharing the same input, fused along
    Cout and zero-padded to a lane-dense multiple of 128 (unmasked stores)."""
    Cin = x.shape[-1]
    ca = p_a["w1"].shape[-1]
    cb = p_b["w1"].shape[-1]
    cout = ca + cb
    coutp = -(-cout // 128) * 128
    w = jnp.concatenate([_largeconv_weight(p_a, Cin),
                         _largeconv_weight(p_b, Cin)], axis=1)
    b = jnp.concatenate([p_a["b1"], p_b["b1"]], axis=0)
    if coutp != cout:
        w = jnp.pad(w, ((0, 0), (0, coutp - cout)))
        b = jnp.pad(b, ((0, coutp - cout),))
    y = _run_taps_conv(x, w, b, taps=_TAPS_LARGECONV, pad=8,
                       relu=False, out_dtype=jnp.float32)
    return y[..., :ca], y[..., ca:cout]


def upsample2x_nearest(x):
    # TODO(synk): custom Upsample class not provided; assume 2x nearest.
    return jnp.repeat(jnp.repeat(x, 2, axis=1), 2, axis=2)


def twinres_forward(f1, f2, f3, params):
    # Backbone features enter the kernels as bf16 (the matmul operand dtype),
    # so the remaining wrapper-level upsample / concat ops move half the bytes.
    f1 = f1.astype(jnp.bfloat16)
    f2 = f2.astype(jnp.bfloat16)
    f3 = f3.astype(jnp.bfloat16)

    # NeckModule.forward
    g3 = conv3x3_bn_relu(f3, *params["neck_conv3"])
    x = jnp.concatenate([upsample2x_nearest(g3), f2], axis=-1)
    g2 = conv3x3_bn_relu(x, *params["neck_conv2"])
    x = jnp.concatenate([upsample2x_nearest(g2), f1], axis=-1)
    g1 = conv3x3_bn_relu(x, *params["neck_conv1"])
    # TODO(synk): fuse upsample+concat and the LargeConv heads into the neck
    # conv kernels (keep g_i resident in VMEM) to drop the remaining
    # wrapper-level HBM round trips.

    # TwinRes head path: contour_i / post_i LargeConvs fused per resolution.
    # TODO(synk): HeatmapHead/DetectHead not provided -> heat-gating omitted;
    # post heads are applied to the ungated neck features (same as contour).
    c1, p1 = largeconv_pair(g1, params["contour1"], params["post1"])
    c2, p2 = largeconv_pair(g2, params["contour2"], params["post2"])
    c3, p3 = largeconv_pair(g3, params["contour3"], params["post3"])
    return g1, g2, g3, c1, c2, c3, p1, p2, p3


# ----------------------------- reference (lax) -----------------------------

def _q(a):
    """Match the kernel's bf16 matmul-operand / neck-output quantization."""
    return a.astype(jnp.bfloat16).astype(jnp.float32)


def _conv_ref(x, w, pad, dilation=1, bias=None):
    y = lax.conv_general_dilated(
        _q(x), _q(w), (1, 1), [(pad, pad), (pad, pad)],
        rhs_dilation=(dilation, dilation),
        dimension_numbers=("NHWC", "HWIO", "NHWC"),
        precision=lax.Precision.HIGHEST)
    if bias is not None:
        y = y + bias
    return y


def _conv3x3_bn_relu_ref(x, w, scale, shift):
    # BN scale folded into the weights before bf16 quantization (matches kernel);
    # kernel emits bf16 neck features, so round the reference the same way.
    return _q(jnp.maximum(_conv_ref(x, w * scale, 1) + shift, 0.0))


def _largeconv_ref(x, p):
    cin, cout = p["w1"].shape
    y = _conv_ref(x, p["w1"].reshape(1, 1, cin, cout), 0, bias=p["b1"])
    y = y + _conv_ref(x, p["w3"], 1, 1)
    y = y + _conv_ref(x, p["w5"], 2, 2)
    y = y + _conv_ref(x, p["w9"], 4, 4)
    y = y + _conv_ref(x, p["w15"], 8, 8)
    return y


def twinres_forward_ref(f1, f2, f3, params):
    g3 = _conv3x3_bn_relu_ref(f3, *params["neck_conv3"])
    x = jnp.concatenate([upsample2x_nearest(g3), f2], axis=-1)
    g2 = _conv3x3_bn_relu_ref(x, *params["neck_conv2"])
    x = jnp.concatenate([upsample2x_nearest(g2), f1], axis=-1)
    g1 = _conv3x3_bn_relu_ref(x, *params["neck_conv1"])
    return (g1, g2, g3,
            _largeconv_ref(g1, params["contour1"]),
            _largeconv_ref(g2, params["contour2"]),
            _largeconv_ref(g3, params["contour3"]),
            _largeconv_ref(g1, params["post1"]),
            _largeconv_ref(g2, params["post2"]),
            _largeconv_ref(g3, params["post3"]))


# ----------------------------- parameter init -----------------------------

def init_conv_bn(key, cin, cout):
    ks = jax.random.split(key, 6)
    w = 0.1 * jax.random.normal(ks[0], (3, 3, cin, cout), jnp.float32)
    b = 0.1 * jax.random.normal(ks[1], (cout,), jnp.float32)
    gamma = 1.0 + 0.1 * jax.random.normal(ks[2], (cout,), jnp.float32)
    beta = 0.1 * jax.random.normal(ks[3], (cout,), jnp.float32)
    mean = 0.1 * jax.random.normal(ks[4], (cout,), jnp.float32)
    var = jnp.abs(jax.random.normal(ks[5], (cout,), jnp.float32)) + 0.5
    scale = gamma / jnp.sqrt(var + 1e-5)        # eval-mode BN folded into conv
    shift = (b - mean) * scale + beta
    return w, scale, shift


def init_largeconv(key, cin, cout):
    ks = jax.random.split(key, 6)
    return {
        "w1": 0.1 * jax.random.normal(ks[0], (cin, cout), jnp.float32),
        "b1": 0.1 * jax.random.normal(ks[1], (cout,), jnp.float32),
        "w3": 0.1 * jax.random.normal(ks[2], (3, 3, cin, cout), jnp.float32),
        "w5": 0.1 * jax.random.normal(ks[3], (3, 3, cin, cout), jnp.float32),
        "w9": 0.1 * jax.random.normal(ks[4], (3, 3, cin, cout), jnp.float32),
        "w15": 0.1 * jax.random.normal(ks[5], (3, 3, cin, cout), jnp.float32),
    }


# ----------------------------- main -----------------------------

if __name__ == "__main__":
    key = jax.random.PRNGKey(0)
    cls_num = 2
    N = 2
    # scaled-down stand-ins for resnet18 backbone channels (128, 256, 512)
    c1, c2, c3 = 8, 16, 32
    cc = min(c1, c2, c3)
    H1 = W1 = 16
    H2 = W2 = 8
    H3 = W3 = 4

    kf1, kf2, kf3, kp = jax.random.split(key, 4)
    f1 = jax.random.normal(kf1, (N, H1, W1, c1), jnp.float32)
    f2 = jax.random.normal(kf2, (N, H2, W2, c2), jnp.float32)
    f3 = jax.random.normal(kf3, (N, H3, W3, c3), jnp.float32)

    ks = jax.random.split(kp, 9)
    params = {
        "neck_conv3": init_conv_bn(ks[0], c3, cc),
        "neck_conv2": init_conv_bn(ks[1], cc + c2, cc),
        "neck_conv1": init_conv_bn(ks[2], cc + c1, cc),
        "contour1": init_largeconv(ks[3], cc, cls_num),
        "contour2": init_largeconv(ks[4], cc, cls_num),
        "contour3": init_largeconv(ks[5], cc, cls_num),
        "post1": init_largeconv(ks[6], cc, cls_num + 6),
        "post2": init_largeconv(ks[7], cc, cls_num + 6),
        "post3": init_largeconv(ks[8], cc, cls_num + 6),
    }

    outs = twinres_forward(f1, f2, f3, params)
    outs = jax.block_until_ready(outs)

    refs = twinres_forward_ref(f1, f2, f3, params)
    for got, want in zip(outs, refs):
        np.testing.assert_allclose(np.asarray(got.astype(jnp.float32)),
                                   np.asarray(want.astype(jnp.float32)),
                                   rtol=2e-2, atol=2e-2)

    print("KERNEL_OK")
</pallas_src>

<mosaic_0001>
module attributes {stable_mosaic.version = 11 : i64} {
  func.func @_taps_conv_kernel(%arg0: i32, %arg1: i32, %arg2: memref<1x4x4x32xbf16, #tpu.memory_space<vmem>>, %arg3: memref<288x8xbf16, #tpu.memory_space<vmem>>, %arg4: memref<1x8xf32, #tpu.memory_space<vmem>>, %arg5: memref<1x4x4x8xbf16, #tpu.memory_space<vmem>>, %arg6: memref<6x6x32xbf16, #tpu.memory_space<vmem>>) attributes {dimension_semantics = [#tpu.dimension_semantics<parallel>, #tpu.dimension_semantics<arbitrary>], iteration_bounds = array<i64: 2, 1>, scalar_prefetch = 0 : i64, scratch_operands = 1 : i64, tpu.core_type = #tpu.core_type<tc>, window_params = [{transform_indices = @transform_0, window_bounds = array<i64: 1, 4, 4, 32>}, {pipeline_mode = #tpu.pipeline_mode<synchronous>, transform_indices = @transform_1, window_bounds = array<i64: 288, 8>}, {pipeline_mode = #tpu.pipeline_mode<synchronous>, transform_indices = @transform_2, window_bounds = array<i64: 1, 8>}, {transform_indices = @transform_3, window_bounds = array<i64: 1, 4, 4, 8>}]} {
    %c0_i32 = arith.constant 0 : i32
    %0 = arith.cmpi eq, %arg1, %c0_i32 : i32
    %1 = arith.extui %0 : i1 to i32
    %c0_i32_0 = arith.constant 0 : i32
    %2 = arith.cmpi ne, %1, %c0_i32_0 : i32
    scf.if %2 {
      %cst_41 = arith.constant 0.000000e+00 : bf16
      %69 = vector.broadcast %cst_41 : bf16 to vector<6x6x32xbf16>
      %c0_42 = arith.constant 0 : index
      %c0_43 = arith.constant 0 : index
      %c0_44 = arith.constant 0 : index
      %70 = vector.load %arg6[%c0_42, %c0_43, %c0_44] : memref<6x6x32xbf16, #tpu.memory_space<vmem>>, vector<6x6x32xbf16>
      tpu.vector_store %arg6[%c0_42, %c0_43, %c0_44], %69 {strides = array<i32>} : memref<6x6x32xbf16, #tpu.memory_space<vmem>>, vector<6x6x32xbf16>,
      %c0_45 = arith.constant 0 : index
      %c0_46 = arith.constant 0 : index
      %c0_47 = arith.constant 0 : index
      %c0_48 = arith.constant 0 : index
      %71 = vector.load %arg2[%c0_45, %c0_46, %c0_47, %c0_48] : memref<1x4x4x32xbf16, #tpu.memory_space<vmem>>, vector<1x4x4x32xbf16>
      %72 = vector.shape_cast %71 : vector<1x4x4x32xbf16> to vector<4x4x32xbf16>
      %c1_49 = arith.constant 1 : index
      %c1_50 = arith.constant 1 : index
      %c0_51 = arith.constant 0 : index
      %73 = vector.load %arg6[%c1_49, %c1_50, %c0_51] : memref<6x6x32xbf16, #tpu.memory_space<vmem>>, vector<4x4x32xbf16>
      tpu.vector_store %arg6[%c1_49, %c1_50, %c0_51], %72 {strides = array<i32>} : memref<6x6x32xbf16, #tpu.memory_space<vmem>>, vector<4x4x32xbf16>,
    } else {
    }
    %c4_i32 = arith.constant 4 : i32
    %3 = arith.muli %arg1, %c4_i32 : i32
    %4 = tpu.assume_multiple %3, 4 : i32
    %cst = arith.constant 0.000000e+00 : f32
    %5 = vector.broadcast %cst : f32 to vector<16x8xf32>
    %c0_i32_1 = arith.constant 0 : i32
    %6 = arith.addi %4, %c0_i32_1 : i32
    %7 = arith.index_cast %6 : i32 to index
    %c0 = arith.constant 0 : index
    %c0_2 = arith.constant 0 : index
    %8 = vector.load %arg6[%7, %c0, %c0_2] : memref<6x6x32xbf16, #tpu.memory_space<vmem>>, vector<4x4x32xbf16>
    %c0_i32_3 = arith.constant 0 : i32
    %9 = arith.addi %4, %c0_i32_3 : i32
    %10 = arith.index_cast %9 : i32 to index
    %c1 = arith.constant 1 : index
    %c0_4 = arith.constant 0 : index
    %11 = vector.load %arg6[%10, %c1, %c0_4] : memref<6x6x32xbf16, #tpu.memory_space<vmem>>, vector<4x4x32xbf16>
    %12 = tpu.concatenate %8, %11 in 2 : vector<4x4x32xbf16>, vector<4x4x32xbf16> -> vector<4x4x64xbf16>
    %13 = vector.shape_cast %12 : vector<4x4x64xbf16> to vector<16x64xbf16>
    %c0_5 = arith.constant 0 : index
    %c0_6 = arith.constant 0 : index
    %14 = vector.load %arg3[%c0_5, %c0_6] : memref<288x8xbf16, #tpu.memory_space<vmem>>, vector<64x8xbf16>
    %cst_7 = arith.constant dense<0.000000e+00> : vector<16x8xf32>
    %15 = tpu.matmul %13, %14, %cst_7 {dimension_numbers = #tpu.dot_dimension_numbers<[1], [0], [0], [1], [0, 0, 1, 1], [], []>} : vector<16x64xbf16>, vector<64x8xbf16>, vector<16x8xf32> -> vector<16x8xf32>
    %16 = arith.addf %5, %15 : vector<16x8xf32>
    %c0_i32_8 = arith.constant 0 : i32
    %17 = arith.addi %4, %c0_i32_8 : i32
    %18 = arith.index_cast %17 : i32 to index
    %c2 = arith.constant 2 : index
    %c0_9 = arith.constant 0 : index
    %19 = vector.load %arg6[%18, %c2, %c0_9] : memref<6x6x32xbf16, #tpu.memory_space<vmem>>, vector<4x4x32xbf16>
    %c1_i32 = arith.constant 1 : i32
    %20 = arith.addi %4, %c1_i32 : i32
    %21 = arith.index_cast %20 : i32 to index
    %c0_10 = arith.constant 0 : index
    %c0_11 = arith.constant 0 : index
    %22 = vector.load %arg6[%21, %c0_10, %c0_11] : memref<6x6x32xbf16, #tpu.memory_space<vmem>>, vector<4x4x32xbf16>
    %23 = tpu.concatenate %19, %22 in 2 : vector<4x4x32xbf16>, vector<4x4x32xbf16> -> vector<4x4x64xbf16>
    %24 = vector.shape_cast %23 : vector<4x4x64xbf16> to vector<16x64xbf16>
    %c64 = arith.constant 64 : index
    %c0_12 = arith.constant 0 : index
    %25 = vector.load %arg3[%c64, %c0_12] : memref<288x8xbf16, #tpu.memory_space<vmem>>, vector<64x8xbf16>
    %cst_13 = arith.constant dense<0.000000e+00> : vector<16x8xf32>
    %26 = tpu.matmul %24, %25, %cst_13 {dimension_numbers = #tpu.dot_dimension_numbers<[1], [0], [0], [1], [0, 0, 1, 1], [], []>} : vector<16x64xbf16>, vector<64x8xbf16>, vector<16x8xf32> -> vector<16x8xf32>
    %27 = arith.addf %16, %26 : vector<16x8xf32>
    %c1_i32_14 = arith.constant 1 : i32
    %28 = arith.addi %4, %c1_i32_14 : i32
    %29 = arith.index_cast %28 : i32 to index
    %c1_15 = arith.constant 1 : index
    %c0_16 = arith.constant 0 : index
    %30 = vector.load %arg6[%29, %c1_15, %c0_16] : memref<6x6x32xbf16, #tpu.memory_space<vmem>>, vector<4x4x32xbf16>
    %c1_i32_17 = arith.constant 1 : i32
    %31 = arith.addi %4, %c1_i32_17 : i32
    %32 = arith.index_cast %31 : i32 to index
    %c2_18 = arith.constant 2 : index
    %c0_19 = arith.constant 0 : index
    %33 = vector.load %arg6[%32, %c2_18, %c0_19] : memref<6x6x32xbf16, #tpu.memory_space<vmem>>, vector<4x4x32xbf16>
    %34 = tpu.concatenate %30, %33 in 2 : vector<4x4x32xbf16>, vector<4x4x32xbf16> -> vector<4x4x64xbf16>
    %35 = vector.shape_cast %34 : vector<4x4x64xbf16> to vector<16x64xbf16>
    %c128 = arith.constant 128 : index
    %c0_20 = arith.constant 0 : index
    %36 = vector.load %arg3[%c128, %c0_20] : memref<288x8xbf16, #tpu.memory_space<vmem>>, vector<64x8xbf16>
    %cst_21 = arith.constant dense<0.000000e+00> : vector<16x8xf32>
    %37 = tpu.matmul %35, %36, %cst_21 {dimension_numbers = #tpu.dot_dimension_numbers<[1], [0], [0], [1], [0, 0, 1, 1], [], []>} : vector<16x64xbf16>, vector<64x8xbf16>, vector<16x8xf32> -> vector<16x8xf32>
    %38 = arith.addf %27, %37 : vector<16x8xf32>
    %c2_i32 = arith.constant 2 : i32
    %39 = arith.addi %4, %c2_i32 : i32
    %40 = arith.index_cast %39 : i32 to index
    %c0_22 = arith.constant 0 : index
    %c0_23 = arith.constant 0 : index
    %41 = vector.load %arg6[%40, %c0_22, %c0_23] : memref<6x6x32xbf16, #tpu.memory_space<vmem>>, vector<4x4x32xbf16>
    %c2_i32_24 = arith.constant 2 : i32
    %42 = arith.addi %4, %c2_i32_24 : i32
    %43 = arith.index_cast %42 : i32 to index
    %c1_25 = arith.constant 1 : index
    %c0_26 = arith.constant 0 : index
    %44 = vector.load %arg6[%43, %c1_25, %c0_26] : memref<6x6x32xbf16, #tpu.memory_space<vmem>>, vector<4x4x32xbf16>
    %45 = tpu.concatenate %41, %44 in 2 : vector<4x4x32xbf16>, vector<4x4x32xbf16> -> vector<4x4x64xbf16>
    %46 = vector.shape_cast %45 : vector<4x4x64xbf16> to vector<16x64xbf16>
    %c192 = arith.constant 192 : index
    %c0_27 = arith.constant 0 : index
    %47 = vector.load %arg3[%c192, %c0_27] : memref<288x8xbf16, #tpu.memory_space<vmem>>, vector<64x8xbf16>
    %cst_28 = arith.constant dense<0.000000e+00> : vector<16x8xf32>
    %48 = tpu.matmul %46, %47, %cst_28 {dimension_numbers = #tpu.dot_dimension_numbers<[1], [0], [0], [1], [0, 0, 1, 1], [], []>} : vector<16x64xbf16>, vector<64x8xbf16>, vector<16x8xf32> -> vector<16x8xf32>
    %49 = arith.addf %38, %48 : vector<16x8xf32>
    %c2_i32_29 = arith.constant 2 : i32
    %50 = arith.addi %4, %c2_i32_29 : i32
    %51 = arith.index_cast %50 : i32 to index
    %c2_30 = arith.constant 2 : index
    %c0_31 = arith.constant 0 : index
    %52 = vector.load %arg6[%51, %c2_30, %c0_31] : memref<6x6x32xbf16, #tpu.memory_space<vmem>>, vector<4x4x32xbf16>
    %53 = vector.shape_cast %52 : vector<4x4x32xbf16> to vector<16x32xbf16>
    %c256 = arith.constant 256 : index
    %c0_32 = arith.constant 0 : index
    %54 = vector.load %arg3[%c256, %c0_32] : memref<288x8xbf16, #tpu.memory_space<vmem>>, vector<32x8xbf16>
    %cst_33 = arith.constant dense<0.000000e+00> : vector<16x8xf32>
    %55 = tpu.matmul %53, %54, %cst_33 {dimension_numbers = #tpu.dot_dimension_numbers<[1], [0], [0], [1], [0, 0, 1, 1], [], []>} : vector<16x32xbf16>, vector<32x8xbf16>, vector<16x8xf32> -> vector<16x8xf32>
    %56 = arith.addf %49, %55 : vector<16x8xf32>
    %c0_34 = arith.constant 0 : index
    %c0_35 = arith.constant 0 : index
    %57 = vector.load %arg4[%c0_34, %c0_35] : memref<1x8xf32, #tpu.memory_space<vmem>>, vector<1x8xf32>
    %58 = vector.shape_cast %57 : vector<1x8xf32> to vector<8xf32>
    %59 = vector.shape_cast %58 : vector<8xf32> to vector<1x8xf32>
    %60 = vector.broadcast %59 : vector<1x8xf32> to vector<16x8xf32>
    %61 = arith.addf %56, %60 : vector<16x8xf32>
    %cst_36 = arith.constant 0.000000e+00 : f32
    %62 = vector.broadcast %cst_36 : f32 to vector<16x8xf32>
    %63 = arith.maximumf %61, %62 : vector<16x8xf32>
    %64 = vector.shape_cast %63 : vector<16x8xf32> to vector<4x4x8xf32>
    %65 = arith.truncf %64 : vector<4x4x8xf32> to vector<4x4x8xbf16>
    %c0_37 = arith.constant 0 : index
    %c0_38 = arith.constant 0 : index
    %c0_39 = arith.constant 0 : index
    %c0_40 = arith.constant 0 : index
    %66 = vector.load %arg5[%c0_37, %c0_38, %c0_39, %c0_40] : memref<1x4x4x8xbf16, #tpu.memory_space<vmem>>, vector<1x4x4x8xbf16>
    %67 = vector.shape_cast %66 : vector<1x4x4x8xbf16> to vector<4x4x8xbf16>
    %68 = vector.shape_cast %65 : vector<4x4x8xbf16> to vector<1x4x4x8xbf16>
    tpu.vector_store %arg5[%c0_37, %c0_38, %c0_39, %c0_40], %68 {strides = array<i32>} : memref<1x4x4x8xbf16, #tpu.memory_space<vmem>>, vector<1x4x4x8xbf16>,
    return
  }
  func.func @transform_0(%arg0: i32, %arg1: i32) -> (i32, i32, i32, i32) {
    %c0_i32 = arith.constant 0 : i32
    %c0_i32_0 = arith.constant 0 : i32
    %c0_i32_1 = arith.constant 0 : i32
    %c0_i32_2 = arith.constant 0 : i32
    return %arg0, %c0_i32, %c0_i32_0, %c0_i32_1 : i32, i32, i32, i32
  }
  func.func @transform_1(%arg0: i32, %arg1: i32) -> (i32, i32) {
    %c0_i32 = arith.constant 0 : i32
    %c0_i32_0 = arith.constant 0 : i32
    %c0_i32_1 = arith.constant 0 : i32
    return %c0_i32, %c0_i32_0 : i32, i32
  }
  func.func @transform_2(%arg0: i32, %arg1: i32) -> (i32, i32) {
    %c0_i32 = arith.constant 0 : i32
    %c0_i32_0 = arith.constant 0 : i32
    %c0_i32_1 = arith.constant 0 : i32
    return %c0_i32, %c0_i32_0 : i32, i32
  }
  func.func @transform_3(%arg0: i32, %arg1: i32) -> (i32, i32, i32, i32) {
    %c0_i32 = arith.constant 0 : i32
    %c0_i32_0 = arith.constant 0 : i32
    %c0_i32_1 = arith.constant 0 : i32
    return %arg0, %arg1, %c0_i32, %c0_i32_0 : i32, i32, i32, i32
  }
}

</mosaic_0001>

<llo_original>
// kernel: tpu_custom_call.1
$region0: #{tpu_custom_call.1}
  #allocation0 [shape = 'u32[]', space=smem, size = 0x4, offset = 0x4, fixed_abs, tag = 'smem constant byte address 0x4 - core index']
  #allocation1 [shape = 'u32[72,128]{1,0:T(1,128)}', space=vmem, size = 0x9000, scoped, tag = 'internal scratch']
  #allocation2 [shape = 'bf16[6,6,32]{2,1,0:T(8,128)(2,1)}', space=vmem, size = 0x3000, scoped, tag = 'scratch operand']
  %s0 = inlined_call_operand.vmem [shape: bf16[2,4,4,32], index: 0, kind: input, shape index: {}]
  %s1 = inlined_call_operand.vmem [shape: bf16[288,8], index: 1, kind: input, shape index: {}]
  %s2 = inlined_call_operand.vmem [shape: f32[1,8], index: 2, kind: input, shape index: {}]
  %s3 = inlined_call_operand.hbm [shape: bf16[2,4,4,8], index: 3, kind: output, shape index: {}]
  %s4 = sld [smem:[#allocation0]]
  $region49: #{tpu_custom_call.1} parent=0
    _
  %s6 = ssub.s32 1, %s4
  %s7 = scalar_select 0, %s6, %s4
  $region1: #{tpu_custom_call.1} parent=0
    #allocation3 [shape = 'u8[8192]{0}', space=vmem, size = 0x2000, scoped, tag = 'output window, operand 0']
    #allocation4 [shape = 's32[2]{0}', space=sflag, size = 0x8, scoped, tag = 'scoped memory for tpu_custom_call.1']
    %8 = vsyncpa [#allocation4], 0
    %s9 = scalar_lea.sflag [#allocation4], 1
    %10 = vsyncpa %s9, 0
    loop: start=0, step=1, limit=4
    $region2: #{tpu_custom_call.1} parent=1 // loop_pre_header
      _
    $region3: #{tpu_custom_call.1} parent=1 // loop_header
      %s12 = sphi 0, %s16
      %p13 = scmp.ge.s32.totalorder %s12, 4
      %s19 = sphi 0, %s31
      %s20 = sphi 0, %s27
      %s21 = sphi 0, %s19
      %s22 = sphi 0, %s20
      %s23 = sphi 0, %s21
      %s24 = sphi 0, %s22
      %s34 = sphi 0, %s36
      %s37 = sphi 0, %s34
      %s38 = sphi 0, %s37
      %s54 = sphi 0, %s38
      %s58 = sphi 0, %s58
      %s60 = sphi 0, %s58
      %s61 = sphi 0, %s60
      %s75 = sphi 0, %s61
      %s79 = sphi 0, %s79
      %s81 = sphi 0, %s79
      %s82 = sphi 0, %s81
      %s96 = sphi 0, %s82
      %s104 = sphi 0, %s106
      %s107 = sphi 0, %s104
      %s108 = sphi 0, %s107
      %s124 = sphi 0, %s108
    $region4: #{tpu_custom_call.1} parent=1 // loop_header_branch
      %15 = sbr.rel (%p13) target = $region8
    $region5: #{tpu_custom_call.1} parent=1 // loop_body
      %s17 = ssub.s32 %s12, 1
      %s18 = ssub.s32 %s12, 2
      %s25 = sadd.s32 1, %s20
      %p26 = scmp.ge.s32.totalorder %s25, 1
      %s27 = scalar_select %p26, 0, %s25
      %s28 = sadd.s32 1, %s19
      %s29 = scalar_select %p26, %s28, %s19
      %p30 = scmp.ge.s32.totalorder %s29, 2
      %s31 = scalar_select %p30, 0, %s29
      %s32 = ssub.s32 %s19, %s31
      %p33 = scmp.eq.s32.totalorder %s32, 0
      %s35 = sadd.s32 %s34, 1
      %s36 = scalar_select %p33, %s34, %s35
      %p39 = pneg %p33
      %p40 = scmp.eq.s32.totalorder %s12, 1
      %p41 = por %p39, %p40
      %p42 = scmp.ne.s32.totalorder %s34, %s37
      %p43 = scmp.eq.s32.totalorder %s12, 0
      %p44 = por %p42, %p43
      %p45 = scmp.ne.s32.totalorder %s34, %s37
      %p46 = scmp.eq.s32.totalorder %s17, 1
      %p47 = por %p45, %p46
      %p48 = scmp.ne.s32.totalorder %s37, %s38
      %p49 = scmp.eq.s32.totalorder %s17, 0
      %p50 = por %p48, %p49
      %p51 = scmp.ne.s32.totalorder %s37, %s38
      %p52 = scmp.eq.s32.totalorder %s18, 1
      %p53 = por %p51, %p52
      %p55 = scmp.ne.s32.totalorder %s38, %s54
      %p56 = scmp.eq.s32.totalorder %s18, 0
      %p57 = por %p55, %p56
      %s59 = sadd.s32 %s58, 1
      %p62 = scmp.eq.s32.totalorder %s12, 1
      %p63 = scmp.ne.s32.totalorder %s58, %s60
      %p64 = scmp.eq.s32.totalorder %s12, 0
      %p65 = por %p63, %p64
      %p66 = scmp.ne.s32.totalorder %s58, %s60
      %p67 = scmp.eq.s32.totalorder %s17, 1
      %p68 = por %p66, %p67
      %p69 = scmp.ne.s32.totalorder %s60, %s61
      %p70 = scmp.eq.s32.totalorder %s17, 0
      %p71 = por %p69, %p70
      %p72 = scmp.ne.s32.totalorder %s60, %s61
      %p73 = scmp.eq.s32.totalorder %s18, 1
      %p74 = por %p72, %p73
      %p76 = scmp.ne.s32.totalorder %s61, %s75
      %p77 = scmp.eq.s32.totalorder %s18, 0
      %p78 = por %p76, %p77
      %s80 = sadd.s32 %s79, 1
      %p83 = scmp.eq.s32.totalorder %s12, 1
      %p84 = scmp.ne.s32.totalorder %s79, %s81
      %p85 = scmp.eq.s32.totalorder %s12, 0
      %p86 = por %p84, %p85
      %p87 = scmp.ne.s32.totalorder %s79, %s81
      %p88 = scmp.eq.s32.totalorder %s17, 1
      %p89 = por %p87, %p88
      %p90 = scmp.ne.s32.totalorder %s81, %s82
      %p91 = scmp.eq.s32.totalorder %s17, 0
      %p92 = por %p90, %p91
      %p93 = scmp.ne.s32.totalorder %s81, %s82
      %p94 = scmp.eq.s32.totalorder %s18, 1
      %p95 = por %p93, %p94
      %p97 = scmp.ne.s32.totalorder %s82, %s96
      %p98 = scmp.eq.s32.totalorder %s18, 0
      %p99 = por %p97, %p98
      %s100 = ssub.s32 %s19, %s31
      %s101 = ssub.s32 %s20, %s27
      %s102 = sor.u32 %s100, %s101
      %p103 = scmp.eq.s32.totalorder %s102, 0
      %s105 = sadd.s32 %s104, 1
      %s106 = scalar_select %p103, %s104, %s105
      %p109 = pneg %p103
      %p110 = scmp.eq.s32.totalorder %s12, 1
      %p111 = por %p109, %p110
      %p112 = scmp.ne.s32.totalorder %s104, %s107
      %p113 = scmp.eq.s32.totalorder %s12, 0
      %p114 = por %p112, %p113
      %p115 = scmp.ne.s32.totalorder %s104, %s107
      %p116 = scmp.eq.s32.totalorder %s17, 1
      %p117 = por %p115, %p116
      %p118 = scmp.ne.s32.totalorder %s107, %s108
      %p119 = scmp.eq.s32.totalorder %s17, 0
      %p120 = por %p118, %p119
      %p121 = scmp.ne.s32.totalorder %s107, %s108
      %p122 = scmp.eq.s32.totalorder %s18, 1
      %p123 = por %p121, %p122
      %p125 = scmp.ne.s32.totalorder %s108, %s124
      %p126 = scmp.eq.s32.totalorder %s18, 0
      %p127 = por %p125, %p126
      %p128 = scmp.le.s32.totalorder 1, %s12
      %p129 = scmp.lt.s32.totalorder %s12, 3
      %p130 = pnand %p128, %p129
      %p131 = pneg %p130
      // Predicated region
      $region9: #{tpu_custom_call.1} parent=5 // pred_check
        _
      $region10: #{tpu_custom_call.1} parent=5 // pred_check_branch
        %133 = sbr.rel (%p130) target = $region12
      $region11: #{tpu_custom_call.1} parent=5 // pred_region
        %s134 = ssub.s32 %s12, 1
        // Predicated region
        $region13: #{tpu_custom_call.1} parent=11 // pred_check
          %p135 = pneg %p71
        $region14: #{tpu_custom_call.1} parent=11 // pred_check_branch
          %137 = sbr.rel (%p135) target = $region16
        $region15: #{tpu_custom_call.1} parent=11 // pred_region
          _
        $region16: #{tpu_custom_call.1} parent=11 // pred_fallthru
          _
        // Predicated region
        $region17: #{tpu_custom_call.1} parent=11 // pred_check
          %p138 = pneg %p92
        $region18: #{tpu_custom_call.1} parent=11 // pred_check_branch
          %140 = sbr.rel (%p138) target = $region20
        $region19: #{tpu_custom_call.1} parent=11 // pred_region
          _
        $region20: #{tpu_custom_call.1} parent=11 // pred_fallthru
          _
      $region12: #{tpu_custom_call.1} parent=5 // pred_fallthru
        _
      %p141 = scmp.lt.s32.totalorder %s12, 2
      // Predicated region
      $region21: #{tpu_custom_call.1} parent=5 // pred_check
        %p142 = pneg %p141
      $region22: #{tpu_custom_call.1} parent=5 // pred_check_branch
        %144 = sbr.rel (%p142) target = $region24
      $region23: #{tpu_custom_call.1} parent=5 // pred_region
        // Predicated region
        $region25: #{tpu_custom_call.1} parent=23 // pred_check
          %p145 = pneg %p44
        $region26: #{tpu_custom_call.1} parent=23 // pred_check_branch
          %147 = sbr.rel (%p145) target = $region28
        $region27: #{tpu_custom_call.1} parent=23 // pred_region
          %p148 = scmp.lt.s32.totalorder %s19, 1
          %s149 = scalar_select %p148, %s19, 1
          %s150 = smul.addr %s149, 4
          %s151 = smul.addr %s150, 2
          %s152 = scalar_lea.vmem %s0, %s151
        $region28: #{tpu_custom_call.1} parent=23 // pred_fallthru
          _
      $region24: #{tpu_custom_call.1} parent=5 // pred_fallthru
        _
      %p153 = scmp.le.s32.totalorder 1, %s12
      %p154 = scmp.lt.s32.totalorder %s12, 3
      %p155 = pnand %p153, %p154
      %p156 = pneg %p155
      // Predicated region
      $region29: #{tpu_custom_call.1} parent=5 // pred_check
        _
      $region30: #{tpu_custom_call.1} parent=5 // pred_check_branch
        %158 = sbr.rel (%p155) target = $region32
      $region31: #{tpu_custom_call.1} parent=5 // pred_region
        %s159 = ssub.s32 %s12, 1
        %p160 = scmp.lt.s32.totalorder %s21, 1
        %s161 = scalar_select %p160, %s21, 1
        %s162 = smul.addr %s161, 4
        %s163 = smul.addr %s162, 2
        %s164 = scalar_lea.vmem %s0, %s163
        %p165 = pneg %p50
        %p166 = pneg %p47
        %p167 = pneg %p71
        %p168 = pneg %p68
        %p169 = pneg %p92
        %p170 = pneg %p89
        %p171 = pneg %p120
        %p172 = pneg %p117
        %s173 = sand.u32 %s107, 1
        %s174 = scalar_lea.sflag [#allocation4], %s173
        %s175 = sand.u32 %s107, 1
        %s176 = smul.addr %s175, 8
        %s177 = scalar_lea.vmem [#allocation3], %s176
        %p178 = scmp.lt.s32.totalorder %s21, 1
        %s179 = scalar_select %p178, %s21, 1
        %s180 = smul.addr %s179, 4
        %s181 = smul.addr %s180, 2
        %s182 = scalar_lea.vmem %s0, %s181
        %s183 = smul.u32 4, %s22
        %p185 = scmp.eq.s32.totalorder %s22, 0
        // Predicated region
        $region33: #{tpu_custom_call.1} parent=31 // pred_check
          %p186 = pneg %p185
        $region34: #{tpu_custom_call.1} parent=31 // pred_check_branch
          %188 = sbr.rel (%p186) target = $region36
        $region35: #{tpu_custom_call.1} parent=31 // pred_region
          %vm189 = vcmask 256000
          %190 = vst.msk [vmem:[#allocation2] sm:$0x7] %vm189, 0
          %191 = vst.msk [vmem:[#allocation2 + $0x4] sm:$0x7] %vm189, 0
          %192 = vst.msk [vmem:[#allocation2 + $0x8] sm:$0x7] %vm189, 0
          %193 = vst.msk [vmem:[#allocation2 + $0xc] sm:$0x7] %vm189, 0
          %194 = vst.msk [vmem:[#allocation2 + $0x10] sm:$0x7] %vm189, 0
          %195 = vst.msk [vmem:[#allocation2 + $0x14] sm:$0x7] %vm189, 0
          %v196 = vld [vmem:[%s182] sm:$0x3]
          %v197 = vld [vmem:[%s182 + $0x2] sm:$0x3]
          %v198 = vld [vmem:[%s182 + $0x4] sm:$0x3]
          %v199 = vld [vmem:[%s182 + $0x6] sm:$0x3]
          %201 = vst [vmem:[#allocation1] ss:$2 sm:$0xff] %v196
          %v202 = vld.sshfl [vmem:[#allocation1] sm:$0xff pattern:$0x75643120]
          %s204 = scalar_lea.vmem [#allocation1], 16
          %205 = vst [vmem:[%s204] ss:$2 sm:$0xff] %v197
          %v206 = vld.sshfl [vmem:[#allocation1 + $0x10] sm:$0xff pattern:$0x75643120]
          %s208 = scalar_lea.vmem [#allocation1], 32
          %209 = vst [vmem:[%s208] ss:$2 sm:$0xff] %v198
          %v210 = vld.sshfl [vmem:[#allocation1 + $0x20] sm:$0xff pattern:$0x75643120]
          %s212 = scalar_lea.vmem [#allocation1], 48
          %213 = vst [vmem:[%s212] ss:$2 sm:$0xff] %v199
          %v214 = vld.sshfl [vmem:[#allocation1 + $0x30] sm:$0xff pattern:$0x75643120]
          %v215 = vshrl.u32 %v202, 16
          %v217 = vrot.slane %v215, 7
          %v218 = vshll.u32 %v202, 16
          %v220 = vor.u32 %v217, %v218
          %v221 = vshrl.u32 %v206, 16
          %v223 = vrot.slane %v221, 7
          %v224 = vshll.u32 %v206, 16
          %v226 = vor.u32 %v223, %v224
          %v227 = vshrl.u32 %v210, 16
          %v229 = vrot.slane %v227, 7
          %v230 = vshll.u32 %v210, 16
          %v232 = vor.u32 %v229, %v230
          %v233 = vshrl.u32 %v214, 16
          %v235 = vrot.slane %v233, 7
          %v236 = vshll.u32 %v214, 16
          %v238 = vor.u32 %v235, %v236
          %s243 = scalar_lea.vmem [#allocation2], 4
          %vm244 = vcmask 256000
          %vm245 = vsmask.f32 2306
          %vm246 = vmand %vm244, %vm245
          %v247 = vld [vmem:[%s243] sm:$0x7]
          %v248 = vsel %vm246, %v220, %v247
          %249 = vst [vmem:[%s243] sm:$0x7] %v248
          %v250 = vld [vmem:[%s243 + $0x4] sm:$0x7]
          %v251 = vsel %vm246, %v226, %v250
          %252 = vst [vmem:[%s243 + $0x4] sm:$0x7] %v251
          %v253 = vld [vmem:[%s243 + $0x8] sm:$0x7]
          %v254 = vsel %vm246, %v232, %v253
          %255 = vst [vmem:[%s243 + $0x8] sm:$0x7] %v254
          %v256 = vld [vmem:[%s243 + $0xc] sm:$0x7]
          %v257 = vsel %vm246, %v238, %v256
          %258 = vst [vmem:[%s243 + $0xc] sm:$0x7] %v257
        $region36: #{tpu_custom_call.1} parent=31 // pred_fallthru
          _
        %s259 = smul.u32 %s22, 4
        %s260 = smul.addr %s259, 4
        %s261 = scalar_lea.vmem [#allocation2], %s260
        %v262 = vld [vmem:[%s261] sm:$0x3]
        %v263 = vld [vmem:[%s261 + $0x4] sm:$0x3]
        %v264 = vld [vmem:[%s261 + $0x8] sm:$0x3]
        %v265 = vld [vmem:[%s261 + $0xc] sm:$0x3]
        %v266 = vld [vmem:[%s261] sm:$0x7]
        %v267 = vld [vmem:[%s261 + $0x4] sm:$0x7]
        %v268 = vld [vmem:[%s261 + $0x8] sm:$0x7]
        %v269 = vld [vmem:[%s261 + $0xc] sm:$0x7]
        %v274 = vunpack.c.l.b16 %v266
        %v275 = vunpack.c.l.b16 %v267
        %v276 = vunpack.c.l.b16 %v268
        %v277 = vunpack.c.l.b16 %v269
        %v278 = vpack.c.b16 %v274, %v274
        %v279 = vpack.c.b16 %v275, %v275
        %v280 = vpack.c.b16 %v276, %v276
        %v281 = vpack.c.b16 %v277, %v277
        %v283 = vshrl.u32 %v278, 16
        %v285 = vshll.u32 %v278, 16
        %v287 = vrot.slane %v285, 1
        %v288 = vor.u32 %v283, %v287
        %v290 = vshrl.u32 %v279, 16
        %v292 = vshll.u32 %v279, 16
        %v294 = vrot.slane %v292, 1
        %v295 = vor.u32 %v290, %v294
        %v297 = vshrl.u32 %v280, 16
        %v299 = vshll.u32 %v280, 16
        %v301 = vrot.slane %v299, 1
        %v302 = vor.u32 %v297, %v301
        %v304 = vshrl.u32 %v281, 16
        %v306 = vshll.u32 %v281, 16
        %v308 = vrot.slane %v306, 1
        %v309 = vor.u32 %v304, %v308
        %310 = vrot.lane.b32.xlu0 %v288, 32
        %v311 = vpop.permute.xlu0 %310
        %312 = vrot.lane.b32.xlu0 %v295, 32
        %v313 = vpop.permute.xlu0 %312
        %314 = vrot.lane.b32.xlu0 %v302, 32
        %v315 = vpop.permute.xlu0 %314
        %316 = vrot.lane.b32.xlu0 %v309, 32
        %v317 = vpop.permute.xlu0 %316
        %vm318 = vcmask 261120
        %v321 = vsel %vm318, %v262, %v311
        %v324 = vsel %vm318, %v263, %v313
        %v327 = vsel %vm318, %v264, %v315
        %v330 = vsel %vm318, %v265, %v317
        %v331 = vld [vmem:[%s1] sm:$0xf]
        %v332 = vld [vmem:[%s1 + $0x4] sm:$0xf]
        %v333 = vld [vmem:[%s1 + $0x8] sm:$0xf]
        %v334 = vld [vmem:[%s1 + $0xc] sm:$0xf]
        %v335 = vld [vmem:[%s1 + $0x10] sm:$0xf]
        %v336 = vld [vmem:[%s1 + $0x14] sm:$0xf]
        %v337 = vld [vmem:[%s1 + $0x18] sm:$0xf]
        %v338 = vld [vmem:[%s1 + $0x1c] sm:$0xf]
        %v339 = vld [vmem:[%s261] sm:$0x6]
        %v340 = vld [vmem:[%s261 + $0x4] sm:$0x6]
        %v341 = vld [vmem:[%s261 + $0x8] sm:$0x6]
        %v342 = vld [vmem:[%s261 + $0xc] sm:$0x6]
        %s343 = sadd.s32 %s259, 1
        %s344 = smul.addr %s343, 4
        %s345 = scalar_lea.vmem [#allocation2], %s344
        %v346 = vld [vmem:[%s345] sm:$0x3]
        %v347 = vld [vmem:[%s345 + $0x4] sm:$0x3]
        %v348 = vld [vmem:[%s345 + $0x8] sm:$0x3]
        %v349 = vld [vmem:[%s345 + $0xc] sm:$0x3]
        %v354 = vunpack.c.l.b16 %v346
        %v355 = vunpack.c.l.b16 %v347
        %v356 = vunpack.c.l.b16 %v348
        %v357 = vunpack.c.l.b16 %v349
        %v358 = vpack.c.b16 %v354, %v354
        %v359 = vpack.c.b16 %v355, %v355
        %v360 = vpack.c.b16 %v356, %v356
        %v361 = vpack.c.b16 %v357, %v357
        %v362 = vrot.slane %v358, 7
        %v363 = vrot.slane %v359, 7
        %v364 = vrot.slane %v360, 7
        %v365 = vrot.slane %v361, 7
        %366 = vrot.lane.b32.xlu0 %v362, 32
        %v367 = vpop.permute.xlu0 %366
        %368 = vrot.lane.b32.xlu0 %v363, 32
        %v369 = vpop.permute.xlu0 %368
        %370 = vrot.lane.b32.xlu0 %v364, 32
        %v371 = vpop.permute.xlu0 %370
        %372 = vrot.lane.b32.xlu0 %v365, 32
        %v373 = vpop.permute.xlu0 %372
        %v376 = vsel %vm318, %v339, %v367
        %v379 = vsel %vm318, %v340, %v369
        %v382 = vsel %vm318, %v341, %v371
        %v385 = vsel %vm318, %v342, %v373
        %v390 = vrot.slane %v376, 2
        %v391 = vrot.slane %v379, 2
        %v392 = vrot.slane %v382, 2
        %v393 = vrot.slane %v385, 2
        %vm394 = vcmask 1040384
        %vm395 = vcmask 1042434
        %vm396 = vmor %vm394, %vm395
        %vm397 = vcmask 1044484
        %vm398 = vmor %vm396, %vm397
        %vm399 = vcmask 1046534
        %vm400 = vmor %vm398, %vm399
        %v401 = vrot.slane %v376, 7
        %v402 = vrot.slane %v401, 2
        %v403 = vrot.slane %v390, 7
        %v404 = vsel %vm400, %v402, %v403
        %v405 = vrot.slane %v379, 7
        %v406 = vrot.slane %v405, 2
        %v407 = vrot.slane %v391, 7
        %v408 = vsel %vm400, %v406, %v407
        %v409 = vrot.slane %v382, 7
        %v410 = vrot.slane %v409, 2
        %v411 = vrot.slane %v392, 7
        %v412 = vsel %vm400, %v410, %v411
        %v413 = vrot.slane %v385, 7
        %v414 = vrot.slane %v413, 2
        %v415 = vrot.slane %v393, 7
        %v416 = vsel %vm400, %v414, %v415
        %v417 = vld [vmem:[%s1 + $0x20] sm:$0xf]
        %v418 = vld [vmem:[%s1 + $0x24] sm:$0xf]
        %v419 = vld [vmem:[%s1 + $0x28] sm:$0xf]
        %v420 = vld [vmem:[%s1 + $0x2c] sm:$0xf]
        %v421 = vld [vmem:[%s1 + $0x30] sm:$0xf]
        %v422 = vld [vmem:[%s1 + $0x34] sm:$0xf]
        %v423 = vld [vmem:[%s1 + $0x38] sm:$0xf]
        %v424 = vld [vmem:[%s1 + $0x3c] sm:$0xf]
        %426 = vst [vmem:[#allocation1] ss:$4 sm:$0xff] %v404
        %s428 = scalar_lea.vmem [#allocation1], 1
        %429 = vst [vmem:[%s428] ss:$4 sm:$0xff] %v408
        %s431 = scalar_lea.vmem [#allocation1], 2
        %432 = vst [vmem:[%s431] ss:$4 sm:$0xff] %v412
        %s434 = scalar_lea.vmem [#allocation1], 3
        %435 = vst [vmem:[%s434] ss:$4 sm:$0xff] %v416
        %v436 = vld.sshfl [vmem:[#allocation1] sm:$0xff pattern:$0x73625140]
        %v445 = vunpack.c.l.b16 %v417
        %v446 = vunpack.c.l.b16 %v418
        %v447 = vunpack.c.l.b16 %v419
        %v448 = vunpack.c.l.b16 %v420
        %v449 = vunpack.c.l.b16 %v421
        %v450 = vunpack.c.l.b16 %v422
        %v451 = vunpack.c.l.b16 %v423
        %v452 = vunpack.c.l.b16 %v424
        %v453 = vpack.c.b16 %v446, %v445
        %v454 = vpack.c.b16 %v448, %v447
        %v455 = vpack.c.b16 %v450, %v449
        %v456 = vpack.c.b16 %v452, %v451
        %vm461 = vcmask 523264
        %v462 = vsel %vm461, %v436, 0
        %464 = vmatpush.bf16.msra.mxu0 0
        %465 = vmatpush.bf16.msra.mxu0 0
        %466 = vmatpush.bf16.msra.mxu0 0
        %467 = vmatpush.bf16.msra.mxu0 0
        %468 = vmatpush.bf16.msra.mxu0 %v456
        %469 = vmatpush.bf16.msra.mxu0 %v455
        %470 = vmatpush.bf16.msra.mxu0 %v454
        %471 = vmatpush.bf16.msra.mxu0 %v453
        %472 = vmatmul.bf16.gmra.mxu0 %v462
        %v473 = vpop.f32.mrf.mxu0
        %v474 = vadd.f32 0.0, %v473
        %v475 = vpop.f32.mrf.mxu0
        %v476 = vadd.f32 0.0, %v475
        %477 = vdwg.mxu0
        %478 = vst [vmem:[#allocation1] ss:$4 sm:$0xff] %v321
        %s479 = scalar_lea.vmem [#allocation1], 1
        %480 = vst [vmem:[%s479] ss:$4 sm:$0xff] %v324
        %s481 = scalar_lea.vmem [#allocation1], 2
        %482 = vst [vmem:[%s481] ss:$4 sm:$0xff] %v327
        %s483 = scalar_lea.vmem [#allocation1], 3
        %484 = vst [vmem:[%s483] ss:$4 sm:$0xff] %v330
        %v485 = vld.sshfl [vmem:[#allocation1] sm:$0xff pattern:$0x73625140]
        %v494 = vunpack.c.l.b16 %v331
        %v495 = vunpack.c.l.b16 %v332
        %v496 = vunpack.c.l.b16 %v333
        %v497 = vunpack.c.l.b16 %v334
        %v498 = vunpack.c.l.b16 %v335
        %v499 = vunpack.c.l.b16 %v336
        %v500 = vunpack.c.l.b16 %v337
        %v501 = vunpack.c.l.b16 %v338
        %v502 = vpack.c.b16 %v495, %v494
        %v503 = vpack.c.b16 %v497, %v496
        %v504 = vpack.c.b16 %v499, %v498
        %v505 = vpack.c.b16 %v501, %v500
        %v510 = vsel %vm461, %v485, 0
        %512 = vmatpush.bf16.msra.mxu0 0
        %513 = vmatpush.bf16.msra.mxu0 0
        %514 = vmatpush.bf16.msra.mxu0 0
        %515 = vmatpush.bf16.msra.mxu0 0
        %516 = vmatpush.bf16.msra.mxu0 %v505
        %517 = vmatpush.bf16.msra.mxu0 %v504
        %518 = vmatpush.bf16.msra.mxu0 %v503
        %519 = vmatpush.bf16.msra.mxu0 %v502
        %520 = vmatmul.bf16.gmra.mxu0 %v510
        %v521 = vpop.f32.mrf.mxu0
        %v522 = vadd.f32 %v474, %v521
        %v523 = vpop.f32.mrf.mxu0
        %v524 = vadd.f32 %v476, %v523
        %525 = vdwg.mxu0
        %v526 = vld [vmem:[%s345] sm:$0x7]
        %v527 = vld [vmem:[%s345 + $0x4] sm:$0x7]
        %v528 = vld [vmem:[%s345 + $0x8] sm:$0x7]
        %v529 = vld [vmem:[%s345 + $0xc] sm:$0x7]
        %v530 = vld [vmem:[%s345] sm:$0x6]
        %v531 = vld [vmem:[%s345 + $0x4] sm:$0x6]
        %v532 = vld [vmem:[%s345 + $0x8] sm:$0x6]
        %v533 = vld [vmem:[%s345 + $0xc] sm:$0x6]
        %v538 = vunpack.c.l.b16 %v530
        %v539 = vunpack.c.l.b16 %v531
        %v540 = vunpack.c.l.b16 %v532
        %v541 = vunpack.c.l.b16 %v533
        %v542 = vpack.c.b16 %v538, %v538
        %v543 = vpack.c.b16 %v539, %v539
        %v544 = vpack.c.b16 %v540, %v540
        %v545 = vpack.c.b16 %v541, %v541
        %v547 = vshrl.u32 %v542, 16
        %v549 = vshll.u32 %v542, 16
        %v551 = vrot.slane %v549, 1
        %v552 = vor.u32 %v547, %v551
        %v554 = vshrl.u32 %v543, 16
        %v556 = vshll.u32 %v543, 16
        %v558 = vrot.slane %v556, 1
        %v559 = vor.u32 %v554, %v558
        %v561 = vshrl.u32 %v544, 16
        %v563 = vshll.u32 %v544, 16
        %v565 = vrot.slane %v563, 1
        %v566 = vor.u32 %v561, %v565
        %v568 = vshrl.u32 %v545, 16
        %v570 = vshll.u32 %v545, 16
        %v572 = vrot.slane %v570, 1
        %v573 = vor.u32 %v568, %v572
        %574 = vrot.lane.b32.xlu0 %v552, 32
        %v575 = vpop.permute.xlu0 %574
        %576 = vrot.lane.b32.xlu0 %v559, 32
        %v577 = vpop.permute.xlu0 %576
        %578 = vrot.lane.b32.xlu0 %v566, 32
        %v579 = vpop.permute.xlu0 %578
        %580 = vrot.lane.b32.xlu0 %v573, 32
        %v581 = vpop.permute.xlu0 %580
        %v584 = vsel %vm318, %v526, %v575
        %v587 = vsel %vm318, %v527, %v577
        %v590 = vsel %vm318, %v528, %v579
        %v593 = vsel %vm318, %v529, %v581
        %v598 = vrot.slane %v584, 2
        %v599 = vrot.slane %v587, 2
        %v600 = vrot.slane %v590, 2
        %v601 = vrot.slane %v593, 2
        %vm602 = vsmask.f32 1280
        %vm603 = vsmask.f32 3336
        %vm604 = vmor %vm602, %vm603
        %vm605 = vsmask.f32 5392
        %vm606 = vmor %vm604, %vm605
        %vm607 = vsmask.f32 7448
        %vm608 = vmor %vm606, %vm607
        %v609 = vshrl.u32 %v584, 16
        %v611 = vrot.slane %v609, 6
        %v612 = vshll.u32 %v584, 16
        %v614 = vrot.slane %v612, 7
        %v615 = vor.u32 %v611, %v614
        %v616 = vrot.slane %v615, 2
        %v618 = vshll.u32 %v598, 16
        %v620 = vrot.slane %v618, 7
        %v621 = vsel %vm608, %v616, %v620
        %v622 = vshrl.u32 %v587, 16
        %v624 = vrot.slane %v622, 6
        %v625 = vshll.u32 %v587, 16
        %v627 = vrot.slane %v625, 7
        %v628 = vor.u32 %v624, %v627
        %v629 = vrot.slane %v628, 2
        %v631 = vshll.u32 %v599, 16
        %v633 = vrot.slane %v631, 7
        %v634 = vsel %vm608, %v629, %v633
        %v635 = vshrl.u32 %v590, 16
        %v637 = vrot.slane %v635, 6
        %v638 = vshll.u32 %v590, 16
        %v640 = vrot.slane %v638, 7
        %v641 = vor.u32 %v637, %v640
        %v642 = vrot.slane %v641, 2
        %v644 = vshll.u32 %v600, 16
        %v646 = vrot.slane %v644, 7
        %v647 = vsel %vm608, %v642, %v646
        %v648 = vshrl.u32 %v593, 16
        %v650 = vrot.slane %v648, 6
        %v651 = vshll.u32 %v593, 16
        %v653 = vrot.slane %v651, 7
        %v654 = vor.u32 %v650, %v653
        %v655 = vrot.slane %v654, 2
        %v657 = vshll.u32 %v601, 16
        %v659 = vrot.slane %v657, 7
        %v660 = vsel %vm608, %v655, %v659
        %v661 = vld [vmem:[%s1 + $0x40] sm:$0xf]
        %v662 = vld [vmem:[%s1 + $0x44] sm:$0xf]
        %v663 = vld [vmem:[%s1 + $0x48] sm:$0xf]
        %v664 = vld [vmem:[%s1 + $0x4c] sm:$0xf]
        %v665 = vld [vmem:[%s1 + $0x50] sm:$0xf]
        %v666 = vld [vmem:[%s1 + $0x54] sm:$0xf]
        %v667 = vld [vmem:[%s1 + $0x58] sm:$0xf]
        %v668 = vld [vmem:[%s1 + $0x5c] sm:$0xf]
        %670 = vst [vmem:[#allocation1] ss:$4 sm:$0xff] %v621
        %s672 = scalar_lea.vmem [#allocation1], 1
        %673 = vst [vmem:[%s672] ss:$4 sm:$0xff] %v634
        %s675 = scalar_lea.vmem [#allocation1], 2
        %676 = vst [vmem:[%s675] ss:$4 sm:$0xff] %v647
        %s678 = scalar_lea.vmem [#allocation1], 3
        %679 = vst [vmem:[%s678] ss:$4 sm:$0xff] %v660
        %v680 = vld.sshfl [vmem:[#allocation1] sm:$0xff pattern:$0x73625140]
        %v689 = vunpack.c.l.b16 %v661
        %v690 = vunpack.c.l.b16 %v662
        %v691 = vunpack.c.l.b16 %v663
        %v692 = vunpack.c.l.b16 %v664
        %v693 = vunpack.c.l.b16 %v665
        %v694 = vunpack.c.l.b16 %v666
        %v695 = vunpack.c.l.b16 %v667
        %v696 = vunpack.c.l.b16 %v668
        %v697 = vpack.c.b16 %v690, %v689
        %v698 = vpack.c.b16 %v692, %v691
        %v699 = vpack.c.b16 %v694, %v693
        %v700 = vpack.c.b16 %v696, %v695
        %v705 = vsel %vm461, %v680, 0
        %707 = vmatpush.bf16.msra.mxu0 0
        %708 = vmatpush.bf16.msra.mxu0 0
        %709 = vmatpush.bf16.msra.mxu0 0
        %710 = vmatpush.bf16.msra.mxu0 0
        %711 = vmatpush.bf16.msra.mxu0 %v700
        %712 = vmatpush.bf16.msra.mxu0 %v699
        %713 = vmatpush.bf16.msra.mxu0 %v698
        %714 = vmatpush.bf16.msra.mxu0 %v697
        %715 = vmatmul.bf16.gmra.mxu0 %v705
        %v716 = vpop.f32.mrf.mxu0
        %v717 = vadd.f32 0.0, %v716
        %v718 = vpop.f32.mrf.mxu0
        %v719 = vadd.f32 0.0, %v718
        %720 = vdwg.mxu0
        %v721 = vadd.f32 %v522, %v717
        %v722 = vadd.f32 %v524, %v719
        %s723 = sadd.s32 %s259, 2
        %s724 = smul.addr %s723, 4
        %s725 = scalar_lea.vmem [#allocation2], %s724
        %v726 = vld [vmem:[%s725] sm:$0x3]
        %v727 = vld [vmem:[%s725 + $0x4] sm:$0x3]
        %v728 = vld [vmem:[%s725 + $0x8] sm:$0x3]
        %v729 = vld [vmem:[%s725 + $0xc] sm:$0x3]
        %v730 = vld [vmem:[%s725] sm:$0x7]
        %v731 = vld [vmem:[%s725 + $0x4] sm:$0x7]
        %v732 = vld [vmem:[%s725 + $0x8] sm:$0x7]
        %v733 = vld [vmem:[%s725 + $0xc] sm:$0x7]
        %v738 = vunpack.c.l.b16 %v730
        %v739 = vunpack.c.l.b16 %v731
        %v740 = vunpack.c.l.b16 %v732
        %v741 = vunpack.c.l.b16 %v733
        %v742 = vpack.c.b16 %v738, %v738
        %v743 = vpack.c.b16 %v739, %v739
        %v744 = vpack.c.b16 %v740, %v740
        %v745 = vpack.c.b16 %v741, %v741
        %v747 = vshrl.u32 %v742, 16
        %v749 = vshll.u32 %v742, 16
        %v751 = vrot.slane %v749, 1
        %v752 = vor.u32 %v747, %v751
        %v754 = vshrl.u32 %v743, 16
        %v756 = vshll.u32 %v743, 16
        %v758 = vrot.slane %v756, 1
        %v759 = vor.u32 %v754, %v758
        %v761 = vshrl.u32 %v744, 16
        %v763 = vshll.u32 %v744, 16
        %v765 = vrot.slane %v763, 1
        %v766 = vor.u32 %v761, %v765
        %v768 = vshrl.u32 %v745, 16
        %v770 = vshll.u32 %v745, 16
        %v772 = vrot.slane %v770, 1
        %v773 = vor.u32 %v768, %v772
        %774 = vrot.lane.b32.xlu0 %v752, 32
        %v775 = vpop.permute.xlu0 %774
        %776 = vrot.lane.b32.xlu0 %v759, 32
        %v777 = vpop.permute.xlu0 %776
        %778 = vrot.lane.b32.xlu0 %v766, 32
        %v779 = vpop.permute.xlu0 %778
        %780 = vrot.lane.b32.xlu0 %v773, 32
        %v781 = vpop.permute.xlu0 %780
        %v784 = vsel %vm318, %v726, %v775
        %v787 = vsel %vm318, %v727, %v777
        %v790 = vsel %vm318, %v728, %v779
        %v793 = vsel %vm318, %v729, %v781
        %v794 = vld [vmem:[%s1 + $0x60] sm:$0xf]
        %v795 = vld [vmem:[%s1 + $0x64] sm:$0xf]
        %v796 = vld [vmem:[%s1 + $0x68] sm:$0xf]
        %v797 = vld [vmem:[%s1 + $0x6c] sm:$0xf]
        %v798 = vld [vmem:[%s1 + $0x70] sm:$0xf]
        %v799 = vld [vmem:[%s1 + $0x74] sm:$0xf]
        %v800 = vld [vmem:[%s1 + $0x78] sm:$0xf]
        %v801 = vld [vmem:[%s1 + $0x7c] sm:$0xf]
        %802 = vst [vmem:[#allocation1] ss:$4 sm:$0xff] %v784
        %s803 = scalar_lea.vmem [#allocation1], 1
        %804 = vst [vmem:[%s803] ss:$4 sm:$0xff] %v787
        %s805 = scalar_lea.vmem [#allocation1], 2
        %806 = vst [vmem:[%s805] ss:$4 sm:$0xff] %v790
        %s807 = scalar_lea.vmem [#allocation1], 3
        %808 = vst [vmem:[%s807] ss:$4 sm:$0xff] %v793
        %v809 = vld.sshfl [vmem:[#allocation1] sm:$0xff pattern:$0x73625140]
        %v818 = vunpack.c.l.b16 %v794
        %v819 = vunpack.c.l.b16 %v795
        %v820 = vunpack.c.l.b16 %v796
        %v821 = vunpack.c.l.b16 %v797
        %v822 = vunpack.c.l.b16 %v798
        %v823 = vunpack.c.l.b16 %v799
        %v824 = vunpack.c.l.b16 %v800
        %v825 = vunpack.c.l.b16 %v801
        %v826 = vpack.c.b16 %v819, %v818
        %v827 = vpack.c.b16 %v821, %v820
        %v828 = vpack.c.b16 %v823, %v822
        %v829 = vpack.c.b16 %v825, %v824
        %v834 = vsel %vm461, %v809, 0
        %836 = vmatpush.bf16.msra.mxu0 0
        %837 = vmatpush.bf16.msra.mxu0 0
        %838 = vmatpush.bf16.msra.mxu0 0
        %839 = vmatpush.bf16.msra.mxu0 0
        %840 = vmatpush.bf16.msra.mxu0 %v829
        %841 = vmatpush.bf16.msra.mxu0 %v828
        %842 = vmatpush.bf16.msra.mxu0 %v827
        %843 = vmatpush.bf16.msra.mxu0 %v826
        %844 = vmatmul.bf16.gmra.mxu0 %v834
        %v845 = vpop.f32.mrf.mxu0
        %v846 = vadd.f32 0.0, %v845
        %v847 = vpop.f32.mrf.mxu0
        %v848 = vadd.f32 0.0, %v847
        %849 = vdwg.mxu0
        %v850 = vadd.f32 %v721, %v846
        %v851 = vadd.f32 %v722, %v848
        %v852 = vld [vmem:[%s725] sm:$0x6]
        %v853 = vld [vmem:[%s725 + $0x4] sm:$0x6]
        %v854 = vld [vmem:[%s725 + $0x8] sm:$0x6]
        %v855 = vld [vmem:[%s725 + $0xc] sm:$0x6]
        %v860 = vrot.slane %v852, 2
        %v861 = vrot.slane %v853, 2
        %v862 = vrot.slane %v854, 2
        %v863 = vrot.slane %v855, 2
        %vm864 = vcmask 1041408
        %v867 = vsel %vm864, %v852, %v860
        %vm869 = vcmask 1043458
        %v870 = vsel %vm869, %v852, %v860
        %v872 = vrot.slane %v870, 2
        %v875 = vsel %vm864, %v853, %v861
        %v877 = vsel %vm869, %v853, %v861
        %v879 = vrot.slane %v877, 2
        %v882 = vsel %vm864, %v854, %v862
        %v884 = vsel %vm869, %v854, %v862
        %v886 = vrot.slane %v884, 2
        %v889 = vsel %vm864, %v855, %v863
        %v891 = vsel %vm869, %v855, %v863
        %v893 = vrot.slane %v891, 2
        %v894 = vrot.slane %v867, 7
        %v895 = vrot.slane %v894, 2
        %v896 = vrot.slane %v872, 7
        %v897 = vsel %vm400, %v895, %v896
        %v898 = vrot.slane %v875, 7
        %v899 = vrot.slane %v898, 2
        %v900 = vrot.slane %v879, 7
        %v901 = vsel %vm400, %v899, %v900
        %v902 = vrot.slane %v882, 7
        %v903 = vrot.slane %v902, 2
        %v904 = vrot.slane %v886, 7
        %v905 = vsel %vm400, %v903, %v904
        %v906 = vrot.slane %v889, 7
        %v907 = vrot.slane %v906, 2
        %v908 = vrot.slane %v893, 7
        %v909 = vsel %vm400, %v907, %v908
        %v910 = vld [vmem:[%s1 + $0x80] sm:$0xf]
        %v911 = vld [vmem:[%s1 + $0x84] sm:$0xf]
        %v912 = vld [vmem:[%s1 + $0x88] sm:$0xf]
        %v913 = vld [vmem:[%s1 + $0x8c] sm:$0xf]
        %915 = vst [vmem:[#allocation1] ss:$4 sm:$0xff] %v897
        %s917 = scalar_lea.vmem [#allocation1], 1
        %918 = vst [vmem:[%s917] ss:$4 sm:$0xff] %v901
        %s920 = scalar_lea.vmem [#allocation1], 2
        %921 = vst [vmem:[%s920] ss:$4 sm:$0xff] %v905
        %s923 = scalar_lea.vmem [#allocation1], 3
        %924 = vst [vmem:[%s923] ss:$4 sm:$0xff] %v909
        %v925 = vld.sshfl [vmem:[#allocation1] sm:$0xff pattern:$0x73625140]
        %v930 = vunpack.c.l.b16 %v910
        %v931 = vunpack.c.l.b16 %v911
        %v932 = vunpack.c.l.b16 %v912
        %v933 = vunpack.c.l.b16 %v913
        %v934 = vpack.c.b16 %v931, %v930
        %v935 = vpack.c.b16 %v933, %v932
        %v938 = vsel %vm318, %v925, 0
        %940 = vmatpush.bf16.msra.mxu0 0
        %941 = vmatpush.bf16.msra.mxu0 0
        %942 = vmatpush.bf16.msra.mxu0 0
        %943 = vmatpush.bf16.msra.mxu0 0
        %944 = vmatpush.bf16.msra.mxu0 0
        %945 = vmatpush.bf16.msra.mxu0 0
        %946 = vmatpush.bf16.msra.mxu0 %v935
        %947 = vmatpush.bf16.msra.mxu0 %v934
        %948 = vmatmul.bf16.gmra.mxu0 %v938
        %v949 = vpop.f32.mrf.mxu0
        %v950 = vadd.f32 0.0, %v949
        %v951 = vpop.f32.mrf.mxu0
        %v952 = vadd.f32 0.0, %v951
        %953 = vdwg.mxu0
        %v954 = vadd.f32 %v850, %v950
        %v955 = vadd.f32 %v851, %v952
        %v956 = vld [vmem:[%s2] sm:$0x1]
        %v958 = vperm.slane %v956, 0
        %v960 = vadd.f32 %v954, %v958
        %v961 = vadd.f32 %v955, %v958
        %v962 = vmax.f32 %v960, 0.0
        %v963 = vmax.f32 %v961, 0.0
        %v966 = vrot.slane %v962, 4
        %v967 = vrot.slane %v963, 4
        %v970 = vpack.c.bf16 %v962, %v962
        %v971 = vpack.c.bf16 %v966, %v966
        %v972 = vpack.c.bf16 %v963, %v963
        %v973 = vpack.c.bf16 %v967, %v967
        %vm974 = vcmask 58368
        %975 = vst.msk [vmem:[%s177] sm:$0x3] %vm974, %v970
        %976 = vst.msk [vmem:[%s177 + $0x2] sm:$0x3] %vm974, %v971
        %977 = vst.msk [vmem:[%s177 + $0x4] sm:$0x3] %vm974, %v972
        %978 = vst.msk [vmem:[%s177 + $0x6] sm:$0x3] %vm974, %v973
        %s979 = sand.u32 %s107, 1
        %s980 = scalar_lea.sflag [#allocation4], %s979
        %s981 = sand.u32 %s107, 1
        %s982 = smul.addr %s981, 8
        %s983 = scalar_lea.vmem [#allocation3], %s982
        // Predicated region
        $region37: #{tpu_custom_call.1} parent=31 // pred_check
          %p984 = pneg %p117
        $region38: #{tpu_custom_call.1} parent=31 // pred_check_branch
          %986 = sbr.rel (%p984) target = $region40
        $region39: #{tpu_custom_call.1} parent=31 // pred_region
          %s987 = smul.u32 4, %s22
          %989 = vsyncadd %s980, 0
          %s990 = smul.addr %s21, 4
          %s991 = sadd.s32 %s987, %s990
          %s992 = smul.addr %s991, 2
          %s993 = scalar_lea.hbm %s3, %s992
          %s994 = sshll.u32 %s983, 4
          %s995 = int_to_ptr.vmem [resolvable:$true] %s994
          %s996 = sshll.u32 %s993, 4
          %s997 = int_to_ptr.hbm [resolvable:$true] %s996
          %1002 = dma.vmem_to_hbm [thread:$0]  %s995, 128, %s997, %s980, 32, 32, 2
        $region40: #{tpu_custom_call.1} parent=31 // pred_fallthru
          _
      $region32: #{tpu_custom_call.1} parent=5 // pred_fallthru
        _
      %p1003 = scmp.le.s32.totalorder 2, %s12
      // Predicated region
      $region41: #{tpu_custom_call.1} parent=5 // pred_check
        %p1004 = pneg %p1003
      $region42: #{tpu_custom_call.1} parent=5 // pred_check_branch
        %1006 = sbr.rel (%p1004) target = $region44
      $region43: #{tpu_custom_call.1} parent=5 // pred_region
        %s1007 = ssub.s32 %s12, 2
        // Predicated region
        $region45: #{tpu_custom_call.1} parent=43 // pred_check
          %p1008 = pneg %p123
        $region46: #{tpu_custom_call.1} parent=43 // pred_check_branch
          %1010 = sbr.rel (%p1008) target = $region48
        $region47: #{tpu_custom_call.1} parent=43 // pred_region
          %s1011 = sand.u32 %s108, 1
          %s1012 = scalar_lea.sflag [#allocation4], %s1011
          %s1013 = sand.u32 %s108, 1
          %s1014 = smul.addr %s1013, 8
          %s1015 = scalar_lea.vmem [#allocation3], %s1014
          %1017 = dma.done %s1012, 128
        $region48: #{tpu_custom_call.1} parent=43 // pred_fallthru
          _
      $region44: #{tpu_custom_call.1} parent=5 // pred_fallthru
        _
    $region6: #{tpu_custom_call.1} parent=1 // loop_footer
      %s16 = sadd.s32 1, %s12
    $region7: #{tpu_custom_call.1} parent=1 // loop_footer_branch
      %11 = sbr.rel target = $region3
    $region8: #{tpu_custom_call.1} parent=1 // loop_exit
      _
    %1018 = vsyncpa [#allocation4], 1
    %s1019 = scalar_lea.sflag [#allocation4], 1
    %1020 = vsyncpa %s1019, 1

</llo_original>
